<compile_context>
chip_gen: v5e
topology: v5e:2x2
jax: 0.10.0
libtpu: 0.0.40
codegen_flags: <defaults>
</compile_context>

<pallas_src>
import functools

import numpy as np
import jax
import jax.numpy as jnp
from jax import lax
from jax.experimental import pallas as pl
from jax.experimental.pallas import tpu as pltpu

EPS = 1e-5


def _round_up(x, m):
    return ((x + m - 1) // m) * m


def _default_row_blocks(B):
    # v7x has 2 TensorCores per chip: keep a 2-way "parallel" row split there.
    # v5e/v6e have a single TC: merge the batch into one grid step (one bigger
    # matmul, no per-step overhead).
    try:
        kind = jax.devices()[0].device_kind.lower()
        if ("v7" in kind or "7x" in kind) and B % 2 == 0:
            return 2
    except Exception:
        pass
    return 1


# --------------------------------- kernel -----------------------------------
def _conv_bn_relu_kernel(x_ref, rhs_ref, shift_ref, o_ref, *, H, K, with_relu):
    """conv(KxK, stride=1, pad folded into the input slab) -> BN shift -> ReLU.

    x_ref:     (Bblk, H+2P, Lpad)  bf16, spatially padded, lane-dense, Lpad % 128 == 0
    rhs_ref:   (K*Lpad, W*Cout)    bf16 banded weight matrix (BN scale folded in)
    shift_ref: (1, W*Cout)         f32 per-output-column BN shift
    o_ref:     (Bblk, H, W*Cout)   f32 lane-dense output
    """
    Bblk = x_ref.shape[0]

    # LHS assembled from ref views: K row-shifted (H, Lpad) slabs per batch
    # element, concatenated at 128-aligned lane offsets; batch elements stacked
    # along rows (H is a multiple of 8).  No lane-misaligned relayouts.
    slabs = []
    for b in range(Bblk):
        slabs.append(jnp.concatenate(
            [x_ref[b, kh:kh + H, :] for kh in range(K)], axis=1))  # (H, K*Lpad)
    lhs = slabs[0] if Bblk == 1 else jnp.concatenate(slabs, axis=0)  # (Bblk*H, K*Lpad)

    # Single MXU matmul: bf16 operands, f32 accumulation.
    acc = jnp.dot(lhs, rhs_ref[...], preferred_element_type=jnp.float32)  # (Bblk*H, W*Cout)

    out = acc + shift_ref[...]
    if with_relu:
        out = jnp.maximum(out, 0.0)

    for b in range(Bblk):
        o_ref[b] = out[b * H:(b + 1) * H, :].astype(o_ref.dtype)


# ------------------------------ weight prepare ------------------------------
def prepare_conv_bn_relu(params, *, H, W, kernel_size=3, stride=1,
                         with_bn=True, with_relu=True, eps=EPS):
    """Build the (cached) banded RHS and per-column shift from the weights.

    Call once per layer (not per forward) and reuse the result.
    """
    assert stride == 1, "stride > 1 not implemented in this kernel"
    assert kernel_size % 2 == 1
    K = kernel_size
    P = (K - 1) // 2

    w = params['w']                                        # (Cout, Cin, K, K) OIHW
    Cout, Cin = int(w.shape[0]), int(w.shape[1])

    # Fold BN (inference / running stats): scale into weights, keep shift.
    if with_bn:
        scale = params['gamma'] / jnp.sqrt(params['var'] + eps)      # (Cout,)
        shift = params['beta'] - params['mean'] * scale              # (Cout,)
    else:
        scale = jnp.ones((Cout,), jnp.float32)
        shift = params.get('bias', jnp.zeros((Cout,), jnp.float32))

    wt = jnp.transpose(w, (2, 3, 1, 0)).astype(jnp.float32)          # HWIO (K,K,Cin,Cout)
    wt = wt * scale[None, None, None, :]

    L = (W + 2 * P) * Cin                                  # lane width of one kh slab
    Lpad = _round_up(max(L, 128), 128)                     # 128-aligned slab width

    # Banded RHS: RHS[(kh, wp, ci), (wo, co)] = wt[kh, wp-wo, ci, co] if 0<=wp-wo<K else 0
    sel = np.zeros((W + 2 * P, K, W), np.float32)
    for kw in range(K):
        for wo in range(W):
            sel[wo + kw, kw, wo] = 1.0
    rhs = jnp.einsum('pkw,akco->apcwo', jnp.asarray(sel), wt)        # (K, W+2P, Cin, W, Cout)
    rhs = rhs.reshape(K, L, W * Cout)
    rhs = jnp.pad(rhs, ((0, 0), (0, Lpad - L), (0, 0)))              # zero rows for lane pad
    rhs = rhs.reshape(K * Lpad, W * Cout).astype(jnp.bfloat16)

    shift_ld = jnp.tile(shift.astype(jnp.float32), W).reshape(1, W * Cout)

    consts = dict(rhs=rhs, shift=shift_ld)
    meta = dict(H=H, W=W, Cin=Cin, Cout=Cout, K=K, P=P, Lpad=Lpad,
                with_relu=bool(with_relu))
    return consts, meta


# ------------------------------ forward wrappers ----------------------------
def conv_bn_relu_lane_dense(x_ld, consts, meta, *, row_blocks=None):
    """Lane-dense layer interface: x_ld (B, H, W*Cin) -> (B, H, W*Cout).

    Chain consecutive ConvBNRelu layers through this function to keep the
    backbone in lane-dense layout (NCHW conversion only at network boundary).
    """
    H, W = meta['H'], meta['W']
    Cin, Cout = meta['Cin'], meta['Cout']
    K, P, Lpad = meta['K'], meta['P'], meta['Lpad']
    WCout = W * Cout

    B = x_ld.shape[0]
    if row_blocks is None:
        row_blocks = _default_row_blocks(B)
    assert B % row_blocks == 0
    Bblk = B // row_blocks

    # Spatial zero padding + lane-alignment padding in the wrapper (XLA pad,
    # fuses with the boundary transpose); cast matmul operand to bf16.
    x_pad = jnp.pad(x_ld.astype(jnp.bfloat16),
                    ((0, 0), (P, P), (P * Cin, Lpad - (W + P) * Cin)))
    # x_pad: (B, H+2P, Lpad), lanes [P*Cin, (W+P)*Cin) carry the data.

    kern = functools.partial(_conv_bn_relu_kernel, H=H, K=K,
                             with_relu=meta['with_relu'])
    out_ld = pl.pallas_call(
        kern,
        out_shape=jax.ShapeDtypeStruct((B, H, WCout), jnp.float32),
        grid_spec=pltpu.PrefetchScalarGridSpec(
            num_scalar_prefetch=0,
            grid=(row_blocks,),
            in_specs=[
                pl.BlockSpec((Bblk, H + 2 * P, Lpad), lambda i: (i, 0, 0)),
                pl.BlockSpec((K * Lpad, WCout), lambda i: (0, 0)),
                pl.BlockSpec((1, WCout), lambda i: (0, 0)),
            ],
            out_specs=pl.BlockSpec((Bblk, H, WCout), lambda i: (i, 0, 0)),
        ),
        compiler_params=pltpu.CompilerParams(
            dimension_semantics=("parallel",)),
    )(x_pad, consts['rhs'], consts['shift'])
    return out_ld


def conv_bn_relu_pallas(x_nchw, consts, meta, *, row_blocks=None):
    """NCHW boundary wrapper matching the PyTorch module's interface."""
    B, Cin, H, W = x_nchw.shape
    x_ld = jnp.transpose(x_nchw, (0, 2, 3, 1)).reshape(B, H, W * Cin)
    out_ld = conv_bn_relu_lane_dense(x_ld, consts, meta, row_blocks=row_blocks)
    Cout = meta['Cout']
    return jnp.transpose(out_ld.reshape(B, H, W, Cout), (0, 3, 1, 2))


# ---------------------------- pure-JAX reference ----------------------------
def conv_bn_relu_ref(x, p, *, stride=1):
    dn = ('NCHW', 'OIHW', 'NCHW')
    K = p['w'].shape[-1]
    pad = (K - 1) // 2
    out = lax.conv_general_dilated(x, p['w'], (stride, stride),
                                   [(pad, pad), (pad, pad)],
                                   dimension_numbers=dn)
    g, b, m, v = (a.reshape(1, -1, 1, 1)
                  for a in (p['gamma'], p['beta'], p['mean'], p['var']))
    out = (out - m) / jnp.sqrt(v + EPS) * g + b
    return jnp.maximum(out, 0.0)


# ---------------------------------- main -------------------------------------
if __name__ == "__main__":
    B, Cin, Cout, H, W = 2, 4, 8, 16, 16      # inplane=4, plane=8, k=3, stride=1

    key = jax.random.PRNGKey(0)
    ks = jax.random.split(key, 6)

    params = dict(
        w=0.1 * jax.random.normal(ks[0], (Cout, Cin, 3, 3), jnp.float32),
        gamma=1.0 + 0.1 * jax.random.normal(ks[1], (Cout,), jnp.float32),
        beta=0.1 * jax.random.normal(ks[2], (Cout,), jnp.float32),
        mean=0.1 * jax.random.normal(ks[3], (Cout,), jnp.float32),
        var=1.0 + 0.1 * jax.random.uniform(ks[4], (Cout,), jnp.float32),
    )
    x = jax.random.normal(ks[5], (B, Cin, H, W), jnp.float32)

    # Build the banded RHS / shift once (cached alongside the weights).
    consts, meta = prepare_conv_bn_relu(params, H=H, W=W, kernel_size=3, stride=1)

    fwd = jax.jit(functools.partial(conv_bn_relu_pallas, meta=meta))
    out = jax.block_until_ready(fwd(x, consts))

    ref = conv_bn_relu_ref(x, params)
    # bf16 matmul operands (f32 accumulation) -> loosened tolerance.
    if not jnp.allclose(out, ref, rtol=3e-2, atol=3e-2):
        raise AssertionError(
            f"mismatch: max abs err = {float(jnp.max(jnp.abs(out - ref)))}")

    print("KERNEL_OK")
</pallas_src>

<mosaic_0001>
module attributes {stable_mosaic.version = 11 : i64} {
  func.func @_conv_bn_relu_kernel(%arg0: i32, %arg1: memref<2x18x128xbf16, #tpu.memory_space<vmem>>, %arg2: memref<384x128xbf16, #tpu.memory_space<vmem>>, %arg3: memref<1x128xf32, #tpu.memory_space<vmem>>, %arg4: memref<2x16x128xf32, #tpu.memory_space<vmem>>) attributes {dimension_semantics = [#tpu.dimension_semantics<parallel>], iteration_bounds = array<i64: 1>, scalar_prefetch = 0 : i64, scratch_operands = 0 : i64, tpu.core_type = #tpu.core_type<tc>, window_params = [{transform_indices = @transform_0, window_bounds = array<i64: 2, 18, 128>}, {pipeline_mode = #tpu.pipeline_mode<synchronous>, transform_indices = @transform_1, window_bounds = array<i64: 384, 128>}, {pipeline_mode = #tpu.pipeline_mode<synchronous>, transform_indices = @transform_2, window_bounds = array<i64: 1, 128>}, {transform_indices = @transform_3, window_bounds = array<i64: 2, 16, 128>}]} {
    %c0 = arith.constant 0 : index
    %c0_0 = arith.constant 0 : index
    %c0_1 = arith.constant 0 : index
    %0 = vector.load %arg1[%c0, %c0_0, %c0_1] : memref<2x18x128xbf16, #tpu.memory_space<vmem>>, vector<1x16x128xbf16>
    %1 = vector.shape_cast %0 : vector<1x16x128xbf16> to vector<16x128xbf16>
    %c0_2 = arith.constant 0 : index
    %c1 = arith.constant 1 : index
    %c0_3 = arith.constant 0 : index
    %2 = vector.load %arg1[%c0_2, %c1, %c0_3] : memref<2x18x128xbf16, #tpu.memory_space<vmem>>, vector<1x16x128xbf16>
    %3 = vector.shape_cast %2 : vector<1x16x128xbf16> to vector<16x128xbf16>
    %c0_4 = arith.constant 0 : index
    %c2 = arith.constant 2 : index
    %c0_5 = arith.constant 0 : index
    %4 = vector.load %arg1[%c0_4, %c2, %c0_5] : memref<2x18x128xbf16, #tpu.memory_space<vmem>>, vector<1x16x128xbf16>
    %5 = vector.shape_cast %4 : vector<1x16x128xbf16> to vector<16x128xbf16>
    %6 = tpu.concatenate %1, %3, %5 in 1 : vector<16x128xbf16>, vector<16x128xbf16>, vector<16x128xbf16> -> vector<16x384xbf16>
    %c1_6 = arith.constant 1 : index
    %c0_7 = arith.constant 0 : index
    %c0_8 = arith.constant 0 : index
    %7 = vector.load %arg1[%c1_6, %c0_7, %c0_8] : memref<2x18x128xbf16, #tpu.memory_space<vmem>>, vector<1x16x128xbf16>
    %8 = vector.shape_cast %7 : vector<1x16x128xbf16> to vector<16x128xbf16>
    %c1_9 = arith.constant 1 : index
    %c1_10 = arith.constant 1 : index
    %c0_11 = arith.constant 0 : index
    %9 = vector.load %arg1[%c1_9, %c1_10, %c0_11] : memref<2x18x128xbf16, #tpu.memory_space<vmem>>, vector<1x16x128xbf16>
    %10 = vector.shape_cast %9 : vector<1x16x128xbf16> to vector<16x128xbf16>
    %c1_12 = arith.constant 1 : index
    %c2_13 = arith.constant 2 : index
    %c0_14 = arith.constant 0 : index
    %11 = vector.load %arg1[%c1_12, %c2_13, %c0_14] : memref<2x18x128xbf16, #tpu.memory_space<vmem>>, vector<1x16x128xbf16>
    %12 = vector.shape_cast %11 : vector<1x16x128xbf16> to vector<16x128xbf16>
    %13 = tpu.concatenate %8, %10, %12 in 1 : vector<16x128xbf16>, vector<16x128xbf16>, vector<16x128xbf16> -> vector<16x384xbf16>
    %14 = tpu.concatenate %6, %13 in 0 : vector<16x384xbf16>, vector<16x384xbf16> -> vector<32x384xbf16>
    %c0_15 = arith.constant 0 : index
    %c0_16 = arith.constant 0 : index
    %15 = vector.load %arg2[%c0_15, %c0_16] : memref<384x128xbf16, #tpu.memory_space<vmem>>, vector<384x128xbf16>
    %cst = arith.constant dense<0.000000e+00> : vector<32x128xf32>
    %16 = tpu.matmul %14, %15, %cst {dimension_numbers = #tpu.dot_dimension_numbers<[1], [0], [0], [1], [0, 0, 1, 1], [], []>} : vector<32x384xbf16>, vector<384x128xbf16>, vector<32x128xf32> -> vector<32x128xf32>
    %c0_17 = arith.constant 0 : index
    %c0_18 = arith.constant 0 : index
    %17 = vector.load %arg3[%c0_17, %c0_18] : memref<1x128xf32, #tpu.memory_space<vmem>>, vector<1x128xf32>
    %18 = vector.broadcast %17 : vector<1x128xf32> to vector<32x128xf32>
    %19 = arith.addf %16, %18 : vector<32x128xf32>
    %cst_19 = arith.constant 0.000000e+00 : f32
    %20 = vector.broadcast %cst_19 : f32 to vector<32x128xf32>
    %21 = arith.maximumf %19, %20 : vector<32x128xf32>
    %22 = vector.extract_strided_slice %21 {offsets = [0, 0], sizes = [16, 128], strides = [1, 1]} : vector<32x128xf32> to vector<16x128xf32>
    %c0_20 = arith.constant 0 : index
    %c0_21 = arith.constant 0 : index
    %c0_22 = arith.constant 0 : index
    %23 = vector.load %arg4[%c0_20, %c0_21, %c0_22] : memref<2x16x128xf32, #tpu.memory_space<vmem>>, vector<1x16x128xf32>
    %24 = vector.shape_cast %23 : vector<1x16x128xf32> to vector<16x128xf32>
    %25 = vector.shape_cast %22 : vector<16x128xf32> to vector<1x16x128xf32>
    tpu.vector_store %arg4[%c0_20, %c0_21, %c0_22], %25 {strides = array<i32>} : memref<2x16x128xf32, #tpu.memory_space<vmem>>, vector<1x16x128xf32>,
    %26 = vector.extract_strided_slice %21 {offsets = [16, 0], sizes = [16, 128], strides = [1, 1]} : vector<32x128xf32> to vector<16x128xf32>
    %c1_23 = arith.constant 1 : index
    %c0_24 = arith.constant 0 : index
    %c0_25 = arith.constant 0 : index
    %27 = vector.load %arg4[%c1_23, %c0_24, %c0_25] : memref<2x16x128xf32, #tpu.memory_space<vmem>>, vector<1x16x128xf32>
    %28 = vector.shape_cast %27 : vector<1x16x128xf32> to vector<16x128xf32>
    %29 = vector.shape_cast %26 : vector<16x128xf32> to vector<1x16x128xf32>
    tpu.vector_store %arg4[%c1_23, %c0_24, %c0_25], %29 {strides = array<i32>} : memref<2x16x128xf32, #tpu.memory_space<vmem>>, vector<1x16x128xf32>,
    return
  }
  func.func @transform_0(%arg0: i32) -> (i32, i32, i32) {
    %c0_i32 = arith.constant 0 : i32
    %c0_i32_0 = arith.constant 0 : i32
    %c0_i32_1 = arith.constant 0 : i32
    return %arg0, %c0_i32, %c0_i32_0 : i32, i32, i32
  }
  func.func @transform_1(%arg0: i32) -> (i32, i32) {
    %c0_i32 = arith.constant 0 : i32
    %c0_i32_0 = arith.constant 0 : i32
    %c0_i32_1 = arith.constant 0 : i32
    return %c0_i32, %c0_i32_0 : i32, i32
  }
  func.func @transform_2(%arg0: i32) -> (i32, i32) {
    %c0_i32 = arith.constant 0 : i32
    %c0_i32_0 = arith.constant 0 : i32
    %c0_i32_1 = arith.constant 0 : i32
    return %c0_i32, %c0_i32_0 : i32, i32
  }
  func.func @transform_3(%arg0: i32) -> (i32, i32, i32) {
    %c0_i32 = arith.constant 0 : i32
    %c0_i32_0 = arith.constant 0 : i32
    %c0_i32_1 = arith.constant 0 : i32
    return %arg0, %c0_i32, %c0_i32_0 : i32, i32, i32
  }
}

</mosaic_0001>

<llo_original>
// kernel: conv_bn_relu_pallas.1
$region0: #{conv_bn_relu_pallas.1}
  #allocation0 [shape = 'u32[]', space=smem, size = 0x4, offset = 0x4, fixed_abs, tag = 'smem constant byte address 0x4 - core index']
  #allocation1 [shape = 'u32[72,128]{1,0:T(1,128)}', space=vmem, size = 0x9000, scoped, tag = 'internal scratch']
  %s0 = inlined_call_operand.vmem [shape: bf16[2,18,128], index: 0, kind: input, shape index: {}]
  %s1 = inlined_call_operand.vmem [shape: bf16[384,128], index: 1, kind: input, shape index: {}]
  %s2 = inlined_call_operand.vmem [shape: f32[1,128], index: 2, kind: input, shape index: {}]
  %s3 = inlined_call_operand.vmem [shape: f32[2,16,128], index: 3, kind: output, shape index: {}]
  %s4 = sld [smem:[#allocation0]]
  $region22: #{conv_bn_relu_pallas.1} parent=0
    _
  %s6 = ssub.s32 1, %s4
  %s7 = scalar_select 0, %s6, %s4
  // Predicated region
  $region2: #{conv_bn_relu_pallas.1} parent=0 // pred_check
    _
  $region3: #{conv_bn_relu_pallas.1} parent=0 // pred_check_branch
    %9 = sbr.rel (0) target = $region5
  $region4: #{conv_bn_relu_pallas.1} parent=0 // pred_region
    _
  $region5: #{conv_bn_relu_pallas.1} parent=0 // pred_fallthru
    _
  // Predicated region
  $region6: #{conv_bn_relu_pallas.1} parent=0 // pred_check
    _
  $region7: #{conv_bn_relu_pallas.1} parent=0 // pred_check_branch
    %11 = sbr.rel (0) target = $region9
  $region8: #{conv_bn_relu_pallas.1} parent=0 // pred_region
    _
  $region9: #{conv_bn_relu_pallas.1} parent=0 // pred_fallthru
    _
  // Predicated region
  $region10: #{conv_bn_relu_pallas.1} parent=0 // pred_check
    _
  $region11: #{conv_bn_relu_pallas.1} parent=0 // pred_check_branch
    %13 = sbr.rel (0) target = $region13
  $region12: #{conv_bn_relu_pallas.1} parent=0 // pred_region
    _
  $region13: #{conv_bn_relu_pallas.1} parent=0 // pred_fallthru
    _
  %v14 = vld [vmem:[%s0] sm:$0xf]
  %v15 = vld [vmem:[%s0 + $0x4] sm:$0xf]
  %v16 = vld [vmem:[%s0 + $0x8] sm:$0x1]
  %v17 = vld [vmem:[%s0] sm:$0xe]
  %v20 = vunpack.c.l.b16 %v14
  %v21 = vunpack.c.l.b16 %v15
  %v22 = vpack.c.b16 %v21, %v20
  %v25 = vunpack.c.l.b16 %v16
  %v26 = vpack.c.b16 %v25, %v25
  %vm27 = vsmask.f32 7424
  %v29 = vshrl.u32 %v22, 16
  %v31 = vshll.u32 %v22, 16
  %v33 = vrot.slane %v31, 1
  %v34 = vor.u32 %v29, %v33
  %v36 = vshll.u32 %v26, 16
  %v38 = vrot.slane %v36, 1
  %v39 = vsel %vm27, %v34, %v38
  %v42 = vunpack.c.l.b16 %v17
  %v43 = vpack.c.b16 %v21, %v42
  %vm44 = vcmask 1046528
  %v45 = vrot.slane %v43, 1
  %v46 = vrot.slane %v26, 1
  %v47 = vsel %vm44, %v45, %v46
  %s49 = scalar_lea.vmem %s0, 12
  %v50 = vld [vmem:[%s49] sm:$0xf]
  %v51 = vld [vmem:[%s49 + $0x4] sm:$0xf]
  %v52 = vld [vmem:[%s49 + $0x8] sm:$0x1]
  %v53 = vld [vmem:[%s49] sm:$0xe]
  %v56 = vunpack.c.l.b16 %v50
  %v57 = vunpack.c.l.b16 %v51
  %v58 = vpack.c.b16 %v57, %v56
  %v61 = vunpack.c.l.b16 %v52
  %v62 = vpack.c.b16 %v61, %v61
  %v64 = vshrl.u32 %v58, 16
  %v66 = vshll.u32 %v58, 16
  %v68 = vrot.slane %v66, 1
  %v69 = vor.u32 %v64, %v68
  %v71 = vshll.u32 %v62, 16
  %v73 = vrot.slane %v71, 1
  %v74 = vsel %vm27, %v69, %v73
  %v77 = vunpack.c.l.b16 %v53
  %v78 = vpack.c.b16 %v57, %v77
  %v79 = vrot.slane %v78, 1
  %v80 = vrot.slane %v62, 1
  %v81 = vsel %vm44, %v79, %v80
  %v83 = vld [vmem:[%s1] sm:$0xf]
  %v84 = vld [vmem:[%s1 + $0x4] sm:$0xf]
  %v85 = vld [vmem:[%s1 + $0x8] sm:$0xf]
  %v86 = vld [vmem:[%s1 + $0xc] sm:$0xf]
  %v87 = vld [vmem:[%s1 + $0x10] sm:$0xf]
  %v88 = vld [vmem:[%s1 + $0x14] sm:$0xf]
  %v89 = vld [vmem:[%s1 + $0x18] sm:$0xf]
  %v90 = vld [vmem:[%s1 + $0x1c] sm:$0xf]
  %v91 = vld [vmem:[%s1 + $0x20] sm:$0xf]
  %v92 = vld [vmem:[%s1 + $0x24] sm:$0xf]
  %v93 = vld [vmem:[%s1 + $0x28] sm:$0xf]
  %v94 = vld [vmem:[%s1 + $0x2c] sm:$0xf]
  %v95 = vld [vmem:[%s1 + $0x30] sm:$0xf]
  %v96 = vld [vmem:[%s1 + $0x34] sm:$0xf]
  %v97 = vld [vmem:[%s1 + $0x38] sm:$0xf]
  %v98 = vld [vmem:[%s1 + $0x3c] sm:$0xf]
  %v99 = vld [vmem:[%s1 + $0x40] sm:$0xf]
  %v100 = vld [vmem:[%s1 + $0x44] sm:$0xf]
  %v101 = vld [vmem:[%s1 + $0x48] sm:$0xf]
  %v102 = vld [vmem:[%s1 + $0x4c] sm:$0xf]
  %v103 = vld [vmem:[%s1 + $0x50] sm:$0xf]
  %v104 = vld [vmem:[%s1 + $0x54] sm:$0xf]
  %v105 = vld [vmem:[%s1 + $0x58] sm:$0xf]
  %v106 = vld [vmem:[%s1 + $0x5c] sm:$0xf]
  %v107 = vld [vmem:[%s1 + $0x60] sm:$0xf]
  %v108 = vld [vmem:[%s1 + $0x64] sm:$0xf]
  %v109 = vld [vmem:[%s1 + $0x68] sm:$0xf]
  %v110 = vld [vmem:[%s1 + $0x6c] sm:$0xf]
  %v111 = vld [vmem:[%s1 + $0x70] sm:$0xf]
  %v112 = vld [vmem:[%s1 + $0x74] sm:$0xf]
  %v113 = vld [vmem:[%s1 + $0x78] sm:$0xf]
  %v114 = vld [vmem:[%s1 + $0x7c] sm:$0xf]
  %v115 = vld [vmem:[%s1 + $0x80] sm:$0xf]
  %v116 = vld [vmem:[%s1 + $0x84] sm:$0xf]
  %v117 = vld [vmem:[%s1 + $0x88] sm:$0xf]
  %v118 = vld [vmem:[%s1 + $0x8c] sm:$0xf]
  %v119 = vld [vmem:[%s1 + $0x90] sm:$0xf]
  %v120 = vld [vmem:[%s1 + $0x94] sm:$0xf]
  %v121 = vld [vmem:[%s1 + $0x98] sm:$0xf]
  %v122 = vld [vmem:[%s1 + $0x9c] sm:$0xf]
  %v123 = vld [vmem:[%s1 + $0xa0] sm:$0xf]
  %v124 = vld [vmem:[%s1 + $0xa4] sm:$0xf]
  %v125 = vld [vmem:[%s1 + $0xa8] sm:$0xf]
  %v126 = vld [vmem:[%s1 + $0xac] sm:$0xf]
  %v127 = vld [vmem:[%s1 + $0xb0] sm:$0xf]
  %v128 = vld [vmem:[%s1 + $0xb4] sm:$0xf]
  %v129 = vld [vmem:[%s1 + $0xb8] sm:$0xf]
  %v130 = vld [vmem:[%s1 + $0xbc] sm:$0xf]
  %v131 = vld [vmem:[%s2] sm:$0x1]
  %v133 = vperm.slane %v131, 0
  %v183 = vunpack.c.l.b16 %v83
  %v184 = vunpack.c.l.b16 %v84
  %v185 = vunpack.c.l.b16 %v85
  %v186 = vunpack.c.l.b16 %v86
  %v187 = vunpack.c.l.b16 %v87
  %v188 = vunpack.c.l.b16 %v88
  %v189 = vunpack.c.l.b16 %v89
  %v190 = vunpack.c.l.b16 %v90
  %v191 = vunpack.c.l.b16 %v91
  %v192 = vunpack.c.l.b16 %v92
  %v193 = vunpack.c.l.b16 %v93
  %v194 = vunpack.c.l.b16 %v94
  %v195 = vunpack.c.l.b16 %v95
  %v196 = vunpack.c.l.b16 %v96
  %v197 = vunpack.c.l.b16 %v97
  %v198 = vunpack.c.l.b16 %v98
  %v199 = vunpack.c.l.b16 %v99
  %v200 = vunpack.c.l.b16 %v100
  %v201 = vunpack.c.l.b16 %v101
  %v202 = vunpack.c.l.b16 %v102
  %v203 = vunpack.c.l.b16 %v103
  %v204 = vunpack.c.l.b16 %v104
  %v205 = vunpack.c.l.b16 %v105
  %v206 = vunpack.c.l.b16 %v106
  %v207 = vunpack.c.l.b16 %v107
  %v208 = vunpack.c.l.b16 %v108
  %v209 = vunpack.c.l.b16 %v109
  %v210 = vunpack.c.l.b16 %v110
  %v211 = vunpack.c.l.b16 %v111
  %v212 = vunpack.c.l.b16 %v112
  %v213 = vunpack.c.l.b16 %v113
  %v214 = vunpack.c.l.b16 %v114
  %v215 = vunpack.c.l.b16 %v115
  %v216 = vunpack.c.l.b16 %v116
  %v217 = vunpack.c.l.b16 %v117
  %v218 = vunpack.c.l.b16 %v118
  %v219 = vunpack.c.l.b16 %v119
  %v220 = vunpack.c.l.b16 %v120
  %v221 = vunpack.c.l.b16 %v121
  %v222 = vunpack.c.l.b16 %v122
  %v223 = vunpack.c.l.b16 %v123
  %v224 = vunpack.c.l.b16 %v124
  %v225 = vunpack.c.l.b16 %v125
  %v226 = vunpack.c.l.b16 %v126
  %v227 = vunpack.c.l.b16 %v127
  %v228 = vunpack.c.l.b16 %v128
  %v229 = vunpack.c.l.b16 %v129
  %v230 = vunpack.c.l.b16 %v130
  %v231 = vpack.c.b16 %v184, %v183
  %v232 = vpack.c.b16 %v186, %v185
  %v233 = vpack.c.b16 %v188, %v187
  %v234 = vpack.c.b16 %v190, %v189
  %v235 = vpack.c.b16 %v192, %v191
  %v236 = vpack.c.b16 %v194, %v193
  %v237 = vpack.c.b16 %v196, %v195
  %v238 = vpack.c.b16 %v198, %v197
  %v239 = vpack.c.b16 %v200, %v199
  %v240 = vpack.c.b16 %v202, %v201
  %v241 = vpack.c.b16 %v204, %v203
  %v242 = vpack.c.b16 %v206, %v205
  %v243 = vpack.c.b16 %v208, %v207
  %v244 = vpack.c.b16 %v210, %v209
  %v245 = vpack.c.b16 %v212, %v211
  %v246 = vpack.c.b16 %v214, %v213
  %v247 = vpack.c.b16 %v216, %v215
  %v248 = vpack.c.b16 %v218, %v217
  %v249 = vpack.c.b16 %v220, %v219
  %v250 = vpack.c.b16 %v222, %v221
  %v251 = vpack.c.b16 %v224, %v223
  %v252 = vpack.c.b16 %v226, %v225
  %v253 = vpack.c.b16 %v228, %v227
  %v254 = vpack.c.b16 %v230, %v229
  %279 = vmatpush.bf16.msra.mxu0 %v238
  %280 = vmatpush.bf16.msra.mxu0 %v237
  %281 = vmatpush.bf16.msra.mxu0 %v236
  %282 = vmatpush.bf16.msra.mxu0 %v235
  %283 = vmatpush.bf16.msra.mxu0 %v234
  %284 = vmatpush.bf16.msra.mxu0 %v233
  %285 = vmatpush.bf16.msra.mxu0 %v232
  %286 = vmatpush.bf16.msra.mxu0 %v231
  %287 = vmatmul.bf16.gmra.mxu0 %v22
  %v288 = vpop.f32.mrf.mxu0
  %v289 = vadd.f32 %v133, %v288
  %v290 = vpop.f32.mrf.mxu0
  %v291 = vadd.f32 %v133, %v290
  %292 = vmatmul.bf16.gmra.mxu0 %v58
  %v293 = vpop.f32.mrf.mxu0
  %v294 = vadd.f32 %v133, %v293
  %v295 = vpop.f32.mrf.mxu0
  %v296 = vadd.f32 %v133, %v295
  %297 = vdwg.mxu0
  %298 = vmatpush.bf16.msra.mxu0 %v246
  %299 = vmatpush.bf16.msra.mxu0 %v245
  %300 = vmatpush.bf16.msra.mxu0 %v244
  %301 = vmatpush.bf16.msra.mxu0 %v243
  %302 = vmatpush.bf16.msra.mxu0 %v242
  %303 = vmatpush.bf16.msra.mxu0 %v241
  %304 = vmatpush.bf16.msra.mxu0 %v240
  %305 = vmatpush.bf16.msra.mxu0 %v239
  %306 = vmatmul.bf16.gmra.mxu0 %v39
  %v307 = vpop.f32.mrf.mxu0
  %v308 = vadd.f32 %v289, %v307
  %v309 = vpop.f32.mrf.mxu0
  %v310 = vadd.f32 %v291, %v309
  %311 = vmatmul.bf16.gmra.mxu0 %v74
  %v312 = vpop.f32.mrf.mxu0
  %v313 = vadd.f32 %v294, %v312
  %v314 = vpop.f32.mrf.mxu0
  %v315 = vadd.f32 %v296, %v314
  %316 = vdwg.mxu0
  %317 = vmatpush.bf16.msra.mxu0 %v254
  %318 = vmatpush.bf16.msra.mxu0 %v253
  %319 = vmatpush.bf16.msra.mxu0 %v252
  %320 = vmatpush.bf16.msra.mxu0 %v251
  %321 = vmatpush.bf16.msra.mxu0 %v250
  %322 = vmatpush.bf16.msra.mxu0 %v249
  %323 = vmatpush.bf16.msra.mxu0 %v248
  %324 = vmatpush.bf16.msra.mxu0 %v247
  %325 = vmatmul.bf16.gmra.mxu0 %v47
  %v326 = vpop.f32.mrf.mxu0
  %v327 = vadd.f32 %v308, %v326
  %v328 = vpop.f32.mrf.mxu0
  %v329 = vadd.f32 %v310, %v328
  %330 = vmatmul.bf16.gmra.mxu0 %v81
  %v331 = vpop.f32.mrf.mxu0
  %v332 = vadd.f32 %v313, %v331
  %v333 = vpop.f32.mrf.mxu0
  %v334 = vadd.f32 %v315, %v333
  %335 = vdwg.mxu0
  %v336 = vmax.f32 %v327, 0.0
  %v337 = vmax.f32 %v329, 0.0
  %v338 = vmax.f32 %v332, 0.0
  %v339 = vmax.f32 %v334, 0.0
  %340 = vst [vmem:[%s3] sm:$0xff] %v336
  %341 = vst [vmem:[%s3 + $0x8] sm:$0xff] %v337
  %s342 = scalar_lea.vmem %s3, 16
  %343 = vst [vmem:[%s342] sm:$0xff] %v338
  %344 = vst [vmem:[%s342 + $0x8] sm:$0xff] %v339
  // Predicated region
  $region14: #{conv_bn_relu_pallas.1} parent=0 // pred_check
    _
  $region15: #{conv_bn_relu_pallas.1} parent=0 // pred_check_branch
    %346 = sbr.rel (0) target = $region17
  $region16: #{conv_bn_relu_pallas.1} parent=0 // pred_region
    _
  $region17: #{conv_bn_relu_pallas.1} parent=0 // pred_fallthru
    _
  // Predicated region
  $region18: #{conv_bn_relu_pallas.1} parent=0 // pred_check
    _
  $region19: #{conv_bn_relu_pallas.1} parent=0 // pred_check_branch
    %348 = sbr.rel (0) target = $region21
  $region20: #{conv_bn_relu_pallas.1} parent=0 // pred_region
    _
  $region21: #{conv_bn_relu_pallas.1} parent=0 // pred_fallthru
    _

</llo_original>
